<compile_context>
chip_gen: v7x
topology: tpu7x:2x2x1
jax: 0.10.0
libtpu: 0.0.40
codegen_flags: <defaults>
</compile_context>

<pallas_src>
import functools

import jax
import jax.numpy as jnp
from jax.experimental import pallas as pl
from jax.experimental.pallas import tpu as pltpu

GEM_P = 3.0
GEM_EPS = 1e-6
LANES = 128
MAX_TILE_ROWS_HARD = 8192


def _round_up(x, m):
    return ((x + m - 1) // m) * m


def _vmem_capacity_bytes():
    try:
        return int(pltpu.get_tpu_info().vmem_capacity_bytes)
    except Exception:
        return 64 * 1024 * 1024          # conservative default (v7x per-TC VMEM)


def _derive_tiling(total_rows, k9, c_pad, max_tile_rows=None):
    """Per-generation row-tile and VMEM limit. Never falls back to an unbounded tile."""
    cap = _vmem_capacity_bytes()
    vmem_limit = int(min(cap // 2, 64 * 1024 * 1024))      # 32 MiB v7x, 64 MiB v5e/v6e
    tile_budget = (vmem_limit * 3) // 5
    # per-row cost: double-buffered bf16 x block + ~3 live (rows, C_PAD) f32 intermediates
    per_row = 2 * k9 * 2 + 3 * c_pad * 4
    max_rows = max(8, (tile_budget // per_row) // 8 * 8)
    max_rows = min(max_rows, MAX_TILE_ROWS_HARD)
    if max_tile_rows is not None:
        max_rows = min(max_rows, max(8, (max_tile_rows // 8) * 8))
    rows8 = _round_up(total_rows, 8)
    tile_rows = rows8 if rows8 <= max_rows else max_rows
    rows_padded = _round_up(total_rows, tile_rows)
    n_tiles = rows_padded // tile_rows
    return tile_rows, rows_padded, n_tiles, vmem_limit


# ---------------------------------------------------------------------------
# Fused kernel: conv3x3 (single K=9*C_in dot) + bias + ReLU + GeM(p=3) MXU
# row-reduction + (on last row-tile) FC projection.
#
#   x_ref    : (1, R, 9*C_in)  bf16   R = TILE_ROWS im2col rows of this batch element
#   w9_ref   : (9*C_in, C_PAD) bf16   conv weight, N zero-padded to 128 lanes
#   mask_ref : (1, 1, R) f32          1.0 for real pixels, 0.0 for padded rows
#   cb_ref   : (1, C_PAD) f32         conv bias (zero in padded lanes)
#   fcw_ref  : (C_PAD, D_PAD) f32,  fcb_ref : (1, D_PAD) f32
#   o_ref    : (1, 1, D_PAD) f32      descriptor block for this batch element
#   gem_acc  : (1, C_PAD) f32 VMEM scratch — running sum of clamped cubes
# ---------------------------------------------------------------------------
def _fused_semantic_kernel(x_ref, w9_ref, mask_ref, cb_ref, fcw_ref, fcb_ref,
                           o_ref, gem_acc, *, inv_hw):
    hi = pl.program_id(1)

    @pl.when(hi == 0)
    def _init():
        gem_acc[...] = jnp.zeros_like(gem_acc)

    x = x_ref[0]                                                     # (R, 9*C_in) bf16
    # conv3x3 as ONE MXU dot: bf16 operands, f32 accumulation, dense 128-lane N.
    y = jnp.dot(x, w9_ref[...], preferred_element_type=jnp.float32)  # (R, C_PAD)
    # bias + ReLU + GeM eps-clamp (ReLU then clamp(eps) == max(x, eps) since eps > 0)
    y = jnp.maximum(y + cb_ref[...], GEM_EPS)
    cubes = y * y * y                                                # GeM p = 3
    # masked row reduction on the MXU: (1, R) x (R, C_PAD) -> (1, C_PAD)
    gem_acc[...] += jnp.dot(mask_ref[0], cubes,
                            preferred_element_type=jnp.float32)

    @pl.when(hi == pl.num_programs(1) - 1)
    def _finalize():
        pooled = gem_acc[...] * inv_hw                               # mean over H*W
        pooled = jnp.exp(jnp.log(pooled) * (1.0 / GEM_P))            # ** (1/p) on the EUP
        o_ref[0] = (jnp.dot(pooled, fcw_ref[...],
                            preferred_element_type=jnp.float32) + fcb_ref[...])


@functools.partial(jax.jit, static_argnames=("tile_rows", "n_tiles", "rows_padded",
                                             "vmem_limit", "desc_dim"))
def _fused_backbone_head(x_nchw, w9_pad, conv_b_pad, fc_w_pad, fc_b_pad, *,
                         tile_rows, n_tiles, rows_padded, vmem_limit, desc_dim):
    b, c_in, h, w = x_nchw.shape
    k9 = w9_pad.shape[0]
    c_pad = w9_pad.shape[1]
    d_pad = fc_w_pad.shape[1]
    total_rows = h * w

    # ---- trace-time layout prep: 9-tap im2col folded into K (cheap XLA glue) ----
    x = jnp.transpose(x_nchw, (0, 2, 3, 1))                        # NCHW -> NHWC
    xp = jnp.pad(x, ((0, 0), (1, 1), (1, 1), (0, 0)))              # (B, H+2, W+2, C_in)
    taps = [xp[:, dh:dh + h, dw:dw + w, :] for dh in range(3) for dw in range(3)]
    x9 = jnp.concatenate(taps, axis=-1).reshape(b, total_rows, k9).astype(jnp.bfloat16)
    xflat = jnp.pad(x9, ((0, 0), (0, rows_padded - total_rows), (0, 0)))

    # row-validity mask (zeroes the contribution of padded rows via the MXU dot)
    mask = (jnp.arange(rows_padded, dtype=jnp.int32) < total_rows).astype(jnp.float32)
    mask = mask.reshape(n_tiles, 1, tile_rows)

    kernel = functools.partial(_fused_semantic_kernel, inv_hw=1.0 / float(total_rows))

    flops = (2 * b * rows_padded * k9 * c_pad          # conv dot
             + 2 * b * rows_padded * c_pad             # masked GeM reduction dot
             + 2 * b * c_pad * d_pad)                  # FC
    bytes_accessed = (xflat.size * 2 + w9_pad.size * 2 + mask.size * 4
                      + conv_b_pad.size * 4 + fc_w_pad.size * 4 + fc_b_pad.size * 4
                      + b * d_pad * 4)

    out = pl.pallas_call(
        kernel,
        out_shape=jax.ShapeDtypeStruct((b, 1, d_pad), jnp.float32),
        grid_spec=pltpu.PrefetchScalarGridSpec(
            num_scalar_prefetch=0,
            grid=(b, n_tiles),
            in_specs=[
                pl.BlockSpec((1, tile_rows, k9), lambda bi, hi: (bi, hi, 0)),
                pl.BlockSpec((k9, c_pad), lambda bi, hi: (0, 0)),
                pl.BlockSpec((1, 1, tile_rows), lambda bi, hi: (hi, 0, 0)),
                pl.BlockSpec((1, c_pad), lambda bi, hi: (0, 0)),
                pl.BlockSpec((c_pad, d_pad), lambda bi, hi: (0, 0)),
                pl.BlockSpec((1, d_pad), lambda bi, hi: (0, 0)),
            ],
            out_specs=pl.BlockSpec((1, 1, d_pad), lambda bi, hi: (bi, 0, 0)),
            scratch_shapes=[pltpu.VMEM((1, c_pad), jnp.float32)],
        ),
        compiler_params=pltpu.CompilerParams(
            dimension_semantics=("parallel", "arbitrary"),
            vmem_limit_bytes=vmem_limit),
        cost_estimate=pl.CostEstimate(
            flops=flops, transcendentals=2 * b * c_pad,
            bytes_accessed=bytes_accessed),
    )(xflat, w9_pad, mask, conv_b_pad, fc_w_pad, fc_b_pad)

    return out.reshape(b, d_pad)[:, :desc_dim]


# ---------------------------------------------------------------------------
# SemanticModel wrapper (forward_type='fp32', fusion=None)
# ---------------------------------------------------------------------------
class SemanticModelPallas:
    def __init__(self, c_in=4, c_feat=32, desc_dim=64, seed=0, max_tile_rows=None):
        self.c_in, self.c_feat, self.desc_dim = c_in, c_feat, desc_dim
        self.max_tile_rows = max_tile_rows
        self.fusion = None  # TODO(synk): fusion module for multiple masks is not defined in the spec
        # TODO(synk): onnx_fp32 / trt_fp32 / trt_int8 forward types have no TPU/Pallas equivalent
        # TODO(synk): conv operands run in bf16 (f32 accumulation) — not a bit-faithful fp32 path
        k0, k1, k2, k3 = jax.random.split(jax.random.PRNGKey(seed), 4)
        # Backbone conv weight in HWIO layout (kh, kw, C_in, C_feat) — reference layout.
        self.conv_w = (jax.random.normal(k0, (3, 3, c_in, c_feat), jnp.float32)
                       * (1.0 / jnp.sqrt(9.0 * c_in)))
        self.conv_b = jax.random.normal(k1, (c_feat,), jnp.float32) * 0.01
        # Head FC (C_feat, D)
        self.fc_w = (jax.random.normal(k2, (c_feat, desc_dim), jnp.float32)
                     * (1.0 / jnp.sqrt(float(c_feat))))
        self.fc_b = jax.random.normal(k3, (desc_dim,), jnp.float32) * 0.01

        self.c_pad = _round_up(c_feat, LANES)
        self.d_pad = _round_up(desc_dim, LANES)
        # Kernel-layout weights: HWIO reshape gives index (dh*3+dw)*C_in + c, matching
        # the im2col tap order; N zero-padded to 128 lanes, bf16 operands.
        self.w9 = jnp.pad(self.conv_w.reshape(9 * c_in, c_feat),
                          ((0, 0), (0, self.c_pad - c_feat))).astype(jnp.bfloat16)
        self.conv_b_pad = jnp.pad(self.conv_b, (0, self.c_pad - c_feat)).reshape(1, self.c_pad)
        self.fc_w_pad = jnp.pad(self.fc_w, ((0, self.c_pad - c_feat),
                                            (0, self.d_pad - desc_dim)))
        self.fc_b_pad = jnp.pad(self.fc_b, (0, self.d_pad - desc_dim)).reshape(1, self.d_pad)

    def _backbone_head(self, masks_nchw):
        # fused backbone (conv3x3+bias+ReLU) + head (GeM p=3 + FC) — single pallas_call
        b, c_in, h, w = masks_nchw.shape
        tile_rows, rows_padded, n_tiles, vmem_limit = _derive_tiling(
            h * w, 9 * c_in, self.c_pad, self.max_tile_rows)
        return _fused_backbone_head(masks_nchw, self.w9, self.conv_b_pad,
                                    self.fc_w_pad, self.fc_b_pad,
                                    tile_rows=tile_rows, n_tiles=n_tiles,
                                    rows_padded=rows_padded, vmem_limit=vmem_limit,
                                    desc_dim=self.desc_dim)

    def forward(self, batch):
        mask_descriptors = {}
        for key, value in batch.items():
            if key.startswith("masks_"):
                mask_descriptors[key] = self._backbone_head(value)   # fp32 forward path
        if len(mask_descriptors) > 1:
            if self.fusion is None:
                raise ValueError("Fusion module is not defined but multiple masks are provided")
            descriptor = self.fusion(mask_descriptors)
        else:
            if self.fusion is not None:
                raise ValueError("Fusion module is defined but only one mask is provided")
            descriptor = list(mask_descriptors.values())[0]
        return {"final_descriptor": descriptor}


# ---------------------------------------------------------------------------
# Pure-JAX reference of the same synthetic backbone + head (for a sanity check)
# ---------------------------------------------------------------------------
def _reference_forward(x_nchw, conv_w_hwio, conv_b, fc_w, fc_b):
    x = jnp.transpose(x_nchw, (0, 2, 3, 1)).astype(jnp.float32)
    feat = jax.lax.conv_general_dilated(
        x, conv_w_hwio, window_strides=(1, 1), padding="SAME",
        dimension_numbers=("NHWC", "HWIO", "NHWC"))
    feat = jnp.maximum(feat + conv_b, 0.0)          # bias + ReLU
    feat = jnp.maximum(feat, GEM_EPS)               # GeM clamp
    pooled = jnp.mean(feat ** GEM_P, axis=(1, 2)) ** (1.0 / GEM_P)
    return pooled @ fc_w + fc_b


if __name__ == "__main__":
    B, C_IN, H, W = 2, 4, 16, 16
    key = jax.random.PRNGKey(0)
    masks = jax.random.normal(key, (B, C_IN, H, W), jnp.float32)   # NCHW boundary layout

    # (1) force small row tiles (64) -> 4 grid steps/image: exercises the multi-step
    #     GeM accumulation (init / accumulate / finalize) path.
    model_mt = SemanticModelPallas(c_in=C_IN, c_feat=32, desc_dim=64, seed=0, max_tile_rows=64)
    desc_mt = jax.block_until_ready(model_mt.forward({"masks_0": masks})["final_descriptor"])

    # (2) default auto-derived tiling -> single fat tile per image (n_tiles == 1).
    model = SemanticModelPallas(c_in=C_IN, c_feat=32, desc_dim=64, seed=0)
    desc = jax.block_until_ready(model.forward({"masks_0": masks})["final_descriptor"])

    assert desc.shape == (B, 64) and desc.dtype == jnp.float32
    assert desc_mt.shape == (B, 64) and desc_mt.dtype == jnp.float32

    ref = _reference_forward(masks, model.conv_w, model.conv_b, model.fc_w, model.fc_b)
    for d in (desc_mt, desc):
        max_err = float(jnp.max(jnp.abs(d - ref)))
        assert jnp.allclose(d, ref, rtol=5e-2, atol=5e-2), f"max abs err {max_err}"

    print("KERNEL_OK")
</pallas_src>

<mosaic_0001>
module attributes {stable_mosaic.version = 11 : i64} {
  func.func @_fused_semantic_kernel(%arg0: i32, %arg1: i32, %arg2: memref<1x64x36xbf16, #tpu.memory_space<vmem>>, %arg3: memref<36x128xbf16, #tpu.memory_space<vmem>>, %arg4: memref<1x1x64xf32, #tpu.memory_space<vmem>>, %arg5: memref<1x128xf32, #tpu.memory_space<vmem>>, %arg6: memref<128x128xf32, #tpu.memory_space<vmem>>, %arg7: memref<1x128xf32, #tpu.memory_space<vmem>>, %arg8: memref<1x1x128xf32, #tpu.memory_space<vmem>>, %arg9: memref<1x128xf32, #tpu.memory_space<vmem>>) attributes {dimension_semantics = [#tpu.dimension_semantics<parallel>, #tpu.dimension_semantics<arbitrary>], iteration_bounds = array<i64: 2, 4>, scalar_prefetch = 0 : i64, scratch_operands = 1 : i64, tpu.core_type = #tpu.core_type<tc>, window_params = [{transform_indices = @transform_0, window_bounds = array<i64: 1, 64, 36>}, {pipeline_mode = #tpu.pipeline_mode<synchronous>, transform_indices = @transform_1, window_bounds = array<i64: 36, 128>}, {transform_indices = @transform_2, window_bounds = array<i64: 1, 1, 64>}, {pipeline_mode = #tpu.pipeline_mode<synchronous>, transform_indices = @transform_3, window_bounds = array<i64: 1, 128>}, {pipeline_mode = #tpu.pipeline_mode<synchronous>, transform_indices = @transform_4, window_bounds = array<i64: 128, 128>}, {pipeline_mode = #tpu.pipeline_mode<synchronous>, transform_indices = @transform_5, window_bounds = array<i64: 1, 128>}, {transform_indices = @transform_6, window_bounds = array<i64: 1, 1, 128>}]} {
    %c0_i32 = arith.constant 0 : i32
    %0 = arith.cmpi eq, %arg1, %c0_i32 : i32
    %1 = arith.extui %0 : i1 to i32
    %c0_i32_0 = arith.constant 0 : i32
    %2 = arith.cmpi ne, %1, %c0_i32_0 : i32
    scf.if %2 {
      %cst_17 = arith.constant 0.000000e+00 : f32
      %23 = vector.broadcast %cst_17 : f32 to vector<1x128xf32>
      %c0_18 = arith.constant 0 : index
      %c0_19 = arith.constant 0 : index
      %24 = vector.load %arg9[%c0_18, %c0_19] : memref<1x128xf32, #tpu.memory_space<vmem>>, vector<1x128xf32>
      tpu.vector_store %arg9[%c0_18, %c0_19], %23 {strides = array<i32>} : memref<1x128xf32, #tpu.memory_space<vmem>>, vector<1x128xf32>,
    } else {
    }
    %c0 = arith.constant 0 : index
    %c0_1 = arith.constant 0 : index
    %c0_2 = arith.constant 0 : index
    %3 = vector.load %arg2[%c0, %c0_1, %c0_2] : memref<1x64x36xbf16, #tpu.memory_space<vmem>>, vector<1x64x36xbf16>
    %4 = vector.shape_cast %3 : vector<1x64x36xbf16> to vector<64x36xbf16>
    %c0_3 = arith.constant 0 : index
    %c0_4 = arith.constant 0 : index
    %5 = vector.load %arg3[%c0_3, %c0_4] : memref<36x128xbf16, #tpu.memory_space<vmem>>, vector<36x128xbf16>
    %cst = arith.constant dense<0.000000e+00> : vector<64x128xf32>
    %6 = tpu.matmul %4, %5, %cst {dimension_numbers = #tpu.dot_dimension_numbers<[1], [0], [0], [1], [0, 0, 1, 1], [], []>} : vector<64x36xbf16>, vector<36x128xbf16>, vector<64x128xf32> -> vector<64x128xf32>
    %c0_5 = arith.constant 0 : index
    %c0_6 = arith.constant 0 : index
    %7 = vector.load %arg5[%c0_5, %c0_6] : memref<1x128xf32, #tpu.memory_space<vmem>>, vector<1x128xf32>
    %8 = vector.broadcast %7 : vector<1x128xf32> to vector<64x128xf32>
    %9 = arith.addf %6, %8 : vector<64x128xf32>
    %cst_7 = arith.constant 9.99999997E-7 : f32
    %10 = vector.broadcast %cst_7 : f32 to vector<64x128xf32>
    %11 = arith.maximumf %9, %10 : vector<64x128xf32>
    %12 = arith.mulf %11, %11 : vector<64x128xf32>
    %13 = arith.mulf %12, %11 : vector<64x128xf32>
    %c0_8 = arith.constant 0 : index
    %c0_9 = arith.constant 0 : index
    %14 = vector.load %arg9[%c0_8, %c0_9] : memref<1x128xf32, #tpu.memory_space<vmem>>, vector<1x128xf32>
    %c0_10 = arith.constant 0 : index
    %c0_11 = arith.constant 0 : index
    %c0_12 = arith.constant 0 : index
    %15 = vector.load %arg4[%c0_10, %c0_11, %c0_12] : memref<1x1x64xf32, #tpu.memory_space<vmem>>, vector<1x1x64xf32>
    %16 = vector.shape_cast %15 : vector<1x1x64xf32> to vector<1x64xf32>
    %cst_13 = arith.constant dense<0.000000e+00> : vector<1x128xf32>
    %17 = tpu.matmul %16, %13, %cst_13 {dimension_numbers = #tpu.dot_dimension_numbers<[1], [0], [0], [1], [0, 0, 1, 1], [], []>} : vector<1x64xf32>, vector<64x128xf32>, vector<1x128xf32> -> vector<1x128xf32>
    %18 = arith.addf %14, %17 : vector<1x128xf32>
    %c0_14 = arith.constant 0 : index
    %c0_15 = arith.constant 0 : index
    %19 = vector.load %arg9[%c0_14, %c0_15] : memref<1x128xf32, #tpu.memory_space<vmem>>, vector<1x128xf32>
    tpu.vector_store %arg9[%c0_14, %c0_15], %18 {strides = array<i32>} : memref<1x128xf32, #tpu.memory_space<vmem>>, vector<1x128xf32>,
    %c3_i32 = arith.constant 3 : i32
    %20 = arith.cmpi eq, %arg1, %c3_i32 : i32
    %21 = arith.extui %20 : i1 to i32
    %c0_i32_16 = arith.constant 0 : i32
    %22 = arith.cmpi ne, %21, %c0_i32_16 : i32
    scf.if %22 {
      %c0_17 = arith.constant 0 : index
      %c0_18 = arith.constant 0 : index
      %23 = vector.load %arg9[%c0_17, %c0_18] : memref<1x128xf32, #tpu.memory_space<vmem>>, vector<1x128xf32>
      %cst_19 = arith.constant 3.906250e-03 : f32
      %24 = vector.broadcast %cst_19 : f32 to vector<1x128xf32>
      %25 = arith.mulf %23, %24 : vector<1x128xf32>
      %26 = math.log %25 : vector<1x128xf32>
      %cst_20 = arith.constant 0.333333343 : f32
      %27 = vector.broadcast %cst_20 : f32 to vector<1x128xf32>
      %28 = arith.mulf %26, %27 : vector<1x128xf32>
      %29 = math.exp %28 : vector<1x128xf32>
      %c0_21 = arith.constant 0 : index
      %c0_22 = arith.constant 0 : index
      %30 = vector.load %arg6[%c0_21, %c0_22] : memref<128x128xf32, #tpu.memory_space<vmem>>, vector<128x128xf32>
      %cst_23 = arith.constant dense<0.000000e+00> : vector<1x128xf32>
      %31 = tpu.matmul %29, %30, %cst_23 {dimension_numbers = #tpu.dot_dimension_numbers<[1], [0], [0], [1], [0, 0, 1, 1], [], []>} : vector<1x128xf32>, vector<128x128xf32>, vector<1x128xf32> -> vector<1x128xf32>
      %c0_24 = arith.constant 0 : index
      %c0_25 = arith.constant 0 : index
      %32 = vector.load %arg7[%c0_24, %c0_25] : memref<1x128xf32, #tpu.memory_space<vmem>>, vector<1x128xf32>
      %33 = arith.addf %31, %32 : vector<1x128xf32>
      %c0_26 = arith.constant 0 : index
      %c0_27 = arith.constant 0 : index
      %c0_28 = arith.constant 0 : index
      %34 = vector.load %arg8[%c0_26, %c0_27, %c0_28] : memref<1x1x128xf32, #tpu.memory_space<vmem>>, vector<1x1x128xf32>
      %35 = vector.shape_cast %34 : vector<1x1x128xf32> to vector<1x128xf32>
      %36 = vector.shape_cast %33 : vector<1x128xf32> to vector<1x1x128xf32>
      tpu.vector_store %arg8[%c0_26, %c0_27, %c0_28], %36 {strides = array<i32>} : memref<1x1x128xf32, #tpu.memory_space<vmem>>, vector<1x1x128xf32>,
    } else {
    }
    return
  }
  func.func @transform_0(%arg0: i32, %arg1: i32) -> (i32, i32, i32) {
    %c0_i32 = arith.constant 0 : i32
    %c0_i32_0 = arith.constant 0 : i32
    return %arg0, %arg1, %c0_i32 : i32, i32, i32
  }
  func.func @transform_1(%arg0: i32, %arg1: i32) -> (i32, i32) {
    %c0_i32 = arith.constant 0 : i32
    %c0_i32_0 = arith.constant 0 : i32
    %c0_i32_1 = arith.constant 0 : i32
    return %c0_i32, %c0_i32_0 : i32, i32
  }
  func.func @transform_2(%arg0: i32, %arg1: i32) -> (i32, i32, i32) {
    %c0_i32 = arith.constant 0 : i32
    %c0_i32_0 = arith.constant 0 : i32
    %c0_i32_1 = arith.constant 0 : i32
    return %arg1, %c0_i32, %c0_i32_0 : i32, i32, i32
  }
  func.func @transform_3(%arg0: i32, %arg1: i32) -> (i32, i32) {
    %c0_i32 = arith.constant 0 : i32
    %c0_i32_0 = arith.constant 0 : i32
    %c0_i32_1 = arith.constant 0 : i32
    return %c0_i32, %c0_i32_0 : i32, i32
  }
  func.func @transform_4(%arg0: i32, %arg1: i32) -> (i32, i32) {
    %c0_i32 = arith.constant 0 : i32
    %c0_i32_0 = arith.constant 0 : i32
    %c0_i32_1 = arith.constant 0 : i32
    return %c0_i32, %c0_i32_0 : i32, i32
  }
  func.func @transform_5(%arg0: i32, %arg1: i32) -> (i32, i32) {
    %c0_i32 = arith.constant 0 : i32
    %c0_i32_0 = arith.constant 0 : i32
    %c0_i32_1 = arith.constant 0 : i32
    return %c0_i32, %c0_i32_0 : i32, i32
  }
  func.func @transform_6(%arg0: i32, %arg1: i32) -> (i32, i32, i32) {
    %c0_i32 = arith.constant 0 : i32
    %c0_i32_0 = arith.constant 0 : i32
    %c0_i32_1 = arith.constant 0 : i32
    return %arg0, %c0_i32, %c0_i32_0 : i32, i32, i32
  }
}

</mosaic_0001>

<llo_original>
// kernel: _fused_backbone_head.1
$region0: #{_fused_backbone_head.1}
  #allocation0 [shape = 'u32[]', space=smem, size = 0x4, offset = 0x4, fixed_abs, tag = 'smem constant byte address 0x4 - core index']
  #allocation1 [shape = 'u32[144,128]{1,0:T(1,128)}', space=vmem, size = 0x12000, scoped, tag = 'internal scratch']
  #allocation2 [shape = 'f32[1,128]{1,0:T(1,128)}', space=vmem, size = 0x200, scoped, tag = 'scratch operand']
  %s0 = inlined_call_operand.vmem [shape: bf16[2,256,36], index: 0, kind: input, shape index: {}]
  %s1 = inlined_call_operand.vmem [shape: bf16[36,128], index: 1, kind: input, shape index: {}]
  %s2 = inlined_call_operand.vmem [shape: f32[4,1,64], index: 2, kind: input, shape index: {}]
  %s3 = inlined_call_operand.vmem [shape: f32[1,128], index: 3, kind: input, shape index: {}]
  %s4 = inlined_call_operand.vmem [shape: f32[128,128], index: 4, kind: input, shape index: {}]
  %s5 = inlined_call_operand.vmem [shape: f32[1,128], index: 5, kind: input, shape index: {}]
  %s6 = inlined_call_operand.hbm [shape: f32[2,1,128], index: 6, kind: output, shape index: {}]
  %s7 = sld [smem:[#allocation0]]
  $region65: #{_fused_backbone_head.1} parent=0
    _
  %s9 = ssub.s32 1, %s7
  %s10 = scalar_select 0, %s9, %s7
  $region1: #{_fused_backbone_head.1} parent=0
    #allocation3 [shape = 'u8[1024]{0}', space=vmem, size = 0x400, scoped, tag = 'output window, operand 0']
    #allocation4 [shape = 's32[2]{0}', space=sflag, size = 0x8, scoped, tag = 'scoped memory for _fused_backbone_head.1']
    %11 = vsyncpa [#allocation4], 0
    %s12 = scalar_lea.sflag [#allocation4], 1
    %13 = vsyncpa %s12, 0
    loop: start=0, step=1, limit=10
    $region2: #{_fused_backbone_head.1} parent=1 // loop_pre_header
      _
    $region3: #{_fused_backbone_head.1} parent=1 // loop_header
      %s15 = sphi 0, %s19
      %p16 = scmp.ge.s32.totalorder %s15, 10
      %s22 = sphi 0, %s34
      %s23 = sphi 0, %s30
      %s24 = sphi 0, %s22
      %s25 = sphi 0, %s23
      %s26 = sphi 0, %s24
      %s27 = sphi 0, %s25
      %s39 = sphi 0, %s41
      %s42 = sphi 0, %s39
      %s43 = sphi 0, %s42
      %s59 = sphi 0, %s43
      %s63 = sphi 0, %s63
      %s65 = sphi 0, %s63
      %s66 = sphi 0, %s65
      %s80 = sphi 0, %s66
      %s86 = sphi 0, %s88
      %s89 = sphi 0, %s86
      %s90 = sphi 0, %s89
      %s106 = sphi 0, %s90
      %s110 = sphi 0, %s110
      %s112 = sphi 0, %s110
      %s113 = sphi 0, %s112
      %s127 = sphi 0, %s113
      %s131 = sphi 0, %s131
      %s133 = sphi 0, %s131
      %s134 = sphi 0, %s133
      %s148 = sphi 0, %s134
      %s152 = sphi 0, %s152
      %s154 = sphi 0, %s152
      %s155 = sphi 0, %s154
      %s169 = sphi 0, %s155
      %s175 = sphi 0, %s177
      %s178 = sphi 0, %s175
      %s179 = sphi 0, %s178
      %s195 = sphi 0, %s179
    $region4: #{_fused_backbone_head.1} parent=1 // loop_header_branch
      %18 = sbr.rel (%p16) target = $region8
    $region5: #{_fused_backbone_head.1} parent=1 // loop_body
      %s20 = ssub.s32 %s15, 1
      %s21 = ssub.s32 %s15, 2
      %s28 = sadd.s32 1, %s23
      %p29 = scmp.ge.s32.totalorder %s28, 4
      %s30 = scalar_select %p29, 0, %s28
      %s31 = sadd.s32 1, %s22
      %s32 = scalar_select %p29, %s31, %s22
      %p33 = scmp.ge.s32.totalorder %s32, 2
      %s34 = scalar_select %p33, 0, %s32
      %s35 = ssub.s32 %s22, %s34
      %s36 = ssub.s32 %s23, %s30
      %s37 = sor.u32 %s35, %s36
      %p38 = scmp.eq.s32.totalorder %s37, 0
      %s40 = sadd.s32 %s39, 1
      %s41 = scalar_select %p38, %s39, %s40
      %p44 = pneg %p38
      %p45 = scmp.eq.s32.totalorder %s15, 7
      %p46 = por %p44, %p45
      %p47 = scmp.ne.s32.totalorder %s39, %s42
      %p48 = scmp.eq.s32.totalorder %s15, 0
      %p49 = por %p47, %p48
      %p50 = scmp.ne.s32.totalorder %s39, %s42
      %p51 = scmp.eq.s32.totalorder %s20, 7
      %p52 = por %p50, %p51
      %p53 = scmp.ne.s32.totalorder %s42, %s43
      %p54 = scmp.eq.s32.totalorder %s20, 0
      %p55 = por %p53, %p54
      %p56 = scmp.ne.s32.totalorder %s42, %s43
      %p57 = scmp.eq.s32.totalorder %s21, 7
      %p58 = por %p56, %p57
      %p60 = scmp.ne.s32.totalorder %s43, %s59
      %p61 = scmp.eq.s32.totalorder %s21, 0
      %p62 = por %p60, %p61
      %s64 = sadd.s32 %s63, 1
      %p67 = scmp.eq.s32.totalorder %s15, 7
      %p68 = scmp.ne.s32.totalorder %s63, %s65
      %p69 = scmp.eq.s32.totalorder %s15, 0
      %p70 = por %p68, %p69
      %p71 = scmp.ne.s32.totalorder %s63, %s65
      %p72 = scmp.eq.s32.totalorder %s20, 7
      %p73 = por %p71, %p72
      %p74 = scmp.ne.s32.totalorder %s65, %s66
      %p75 = scmp.eq.s32.totalorder %s20, 0
      %p76 = por %p74, %p75
      %p77 = scmp.ne.s32.totalorder %s65, %s66
      %p78 = scmp.eq.s32.totalorder %s21, 7
      %p79 = por %p77, %p78
      %p81 = scmp.ne.s32.totalorder %s66, %s80
      %p82 = scmp.eq.s32.totalorder %s21, 0
      %p83 = por %p81, %p82
      %s84 = ssub.s32 %s23, %s30
      %p85 = scmp.eq.s32.totalorder %s84, 0
      %s87 = sadd.s32 %s86, 1
      %s88 = scalar_select %p85, %s86, %s87
      %p91 = pneg %p85
      %p92 = scmp.eq.s32.totalorder %s15, 7
      %p93 = por %p91, %p92
      %p94 = scmp.ne.s32.totalorder %s86, %s89
      %p95 = scmp.eq.s32.totalorder %s15, 0
      %p96 = por %p94, %p95
      %p97 = scmp.ne.s32.totalorder %s86, %s89
      %p98 = scmp.eq.s32.totalorder %s20, 7
      %p99 = por %p97, %p98
      %p100 = scmp.ne.s32.totalorder %s89, %s90
      %p101 = scmp.eq.s32.totalorder %s20, 0
      %p102 = por %p100, %p101
      %p103 = scmp.ne.s32.totalorder %s89, %s90
      %p104 = scmp.eq.s32.totalorder %s21, 7
      %p105 = por %p103, %p104
      %p107 = scmp.ne.s32.totalorder %s90, %s106
      %p108 = scmp.eq.s32.totalorder %s21, 0
      %p109 = por %p107, %p108
      %s111 = sadd.s32 %s110, 1
      %p114 = scmp.eq.s32.totalorder %s15, 7
      %p115 = scmp.ne.s32.totalorder %s110, %s112
      %p116 = scmp.eq.s32.totalorder %s15, 0
      %p117 = por %p115, %p116
      %p118 = scmp.ne.s32.totalorder %s110, %s112
      %p119 = scmp.eq.s32.totalorder %s20, 7
      %p120 = por %p118, %p119
      %p121 = scmp.ne.s32.totalorder %s112, %s113
      %p122 = scmp.eq.s32.totalorder %s20, 0
      %p123 = por %p121, %p122
      %p124 = scmp.ne.s32.totalorder %s112, %s113
      %p125 = scmp.eq.s32.totalorder %s21, 7
      %p126 = por %p124, %p125
      %p128 = scmp.ne.s32.totalorder %s113, %s127
      %p129 = scmp.eq.s32.totalorder %s21, 0
      %p130 = por %p128, %p129
      %s132 = sadd.s32 %s131, 1
      %p135 = scmp.eq.s32.totalorder %s15, 7
      %p136 = scmp.ne.s32.totalorder %s131, %s133
      %p137 = scmp.eq.s32.totalorder %s15, 0
      %p138 = por %p136, %p137
      %p139 = scmp.ne.s32.totalorder %s131, %s133
      %p140 = scmp.eq.s32.totalorder %s20, 7
      %p141 = por %p139, %p140
      %p142 = scmp.ne.s32.totalorder %s133, %s134
      %p143 = scmp.eq.s32.totalorder %s20, 0
      %p144 = por %p142, %p143
      %p145 = scmp.ne.s32.totalorder %s133, %s134
      %p146 = scmp.eq.s32.totalorder %s21, 7
      %p147 = por %p145, %p146
      %p149 = scmp.ne.s32.totalorder %s134, %s148
      %p150 = scmp.eq.s32.totalorder %s21, 0
      %p151 = por %p149, %p150
      %s153 = sadd.s32 %s152, 1
      %p156 = scmp.eq.s32.totalorder %s15, 7
      %p157 = scmp.ne.s32.totalorder %s152, %s154
      %p158 = scmp.eq.s32.totalorder %s15, 0
      %p159 = por %p157, %p158
      %p160 = scmp.ne.s32.totalorder %s152, %s154
      %p161 = scmp.eq.s32.totalorder %s20, 7
      %p162 = por %p160, %p161
      %p163 = scmp.ne.s32.totalorder %s154, %s155
      %p164 = scmp.eq.s32.totalorder %s20, 0
      %p165 = por %p163, %p164
      %p166 = scmp.ne.s32.totalorder %s154, %s155
      %p167 = scmp.eq.s32.totalorder %s21, 7
      %p168 = por %p166, %p167
      %p170 = scmp.ne.s32.totalorder %s155, %s169
      %p171 = scmp.eq.s32.totalorder %s21, 0
      %p172 = por %p170, %p171
      %s173 = ssub.s32 %s22, %s34
      %p174 = scmp.eq.s32.totalorder %s173, 0
      %s176 = sadd.s32 %s175, 1
      %s177 = scalar_select %p174, %s175, %s176
      %p180 = pneg %p174
      %p181 = scmp.eq.s32.totalorder %s15, 7
      %p182 = por %p180, %p181
      %p183 = scmp.ne.s32.totalorder %s175, %s178
      %p184 = scmp.eq.s32.totalorder %s15, 0
      %p185 = por %p183, %p184
      %p186 = scmp.ne.s32.totalorder %s175, %s178
      %p187 = scmp.eq.s32.totalorder %s20, 7
      %p188 = por %p186, %p187
      %p189 = scmp.ne.s32.totalorder %s178, %s179
      %p190 = scmp.eq.s32.totalorder %s20, 0
      %p191 = por %p189, %p190
      %p192 = scmp.ne.s32.totalorder %s178, %s179
      %p193 = scmp.eq.s32.totalorder %s21, 7
      %p194 = por %p192, %p193
      %p196 = scmp.ne.s32.totalorder %s179, %s195
      %p197 = scmp.eq.s32.totalorder %s21, 0
      %p198 = por %p196, %p197
      %p199 = scmp.le.s32.totalorder 1, %s15
      %p200 = scmp.lt.s32.totalorder %s15, 9
      %p201 = pnand %p199, %p200
      %p202 = pneg %p201
      // Predicated region
      $region9: #{_fused_backbone_head.1} parent=5 // pred_check
        _
      $region10: #{_fused_backbone_head.1} parent=5 // pred_check_branch
        %204 = sbr.rel (%p201) target = $region12
      $region11: #{_fused_backbone_head.1} parent=5 // pred_region
        %s205 = ssub.s32 %s15, 1
        // Predicated region
        $region13: #{_fused_backbone_head.1} parent=11 // pred_check
          %p206 = pneg %p76
        $region14: #{_fused_backbone_head.1} parent=11 // pred_check_branch
          %208 = sbr.rel (%p206) target = $region16
        $region15: #{_fused_backbone_head.1} parent=11 // pred_region
          _
        $region16: #{_fused_backbone_head.1} parent=11 // pred_fallthru
          _
        // Predicated region
        $region17: #{_fused_backbone_head.1} parent=11 // pred_check
          %p209 = pneg %p123
        $region18: #{_fused_backbone_head.1} parent=11 // pred_check_branch
          %211 = sbr.rel (%p209) target = $region20
        $region19: #{_fused_backbone_head.1} parent=11 // pred_region
          _
        $region20: #{_fused_backbone_head.1} parent=11 // pred_fallthru
          _
        // Predicated region
        $region21: #{_fused_backbone_head.1} parent=11 // pred_check
          %p212 = pneg %p144
        $region22: #{_fused_backbone_head.1} parent=11 // pred_check_branch
          %214 = sbr.rel (%p212) target = $region24
        $region23: #{_fused_backbone_head.1} parent=11 // pred_region
          _
        $region24: #{_fused_backbone_head.1} parent=11 // pred_fallthru
          _
        // Predicated region
        $region25: #{_fused_backbone_head.1} parent=11 // pred_check
          %p215 = pneg %p165
        $region26: #{_fused_backbone_head.1} parent=11 // pred_check_branch
          %217 = sbr.rel (%p215) target = $region28
        $region27: #{_fused_backbone_head.1} parent=11 // pred_region
          _
        $region28: #{_fused_backbone_head.1} parent=11 // pred_fallthru
          _
      $region12: #{_fused_backbone_head.1} parent=5 // pred_fallthru
        _
      %p218 = scmp.lt.s32.totalorder %s15, 8
      // Predicated region
      $region29: #{_fused_backbone_head.1} parent=5 // pred_check
        %p219 = pneg %p218
      $region30: #{_fused_backbone_head.1} parent=5 // pred_check_branch
        %221 = sbr.rel (%p219) target = $region32
      $region31: #{_fused_backbone_head.1} parent=5 // pred_region
        // Predicated region
        $region33: #{_fused_backbone_head.1} parent=31 // pred_check
          %p222 = pneg %p49
        $region34: #{_fused_backbone_head.1} parent=31 // pred_check_branch
          %224 = sbr.rel (%p222) target = $region36
        $region35: #{_fused_backbone_head.1} parent=31 // pred_region
          %s225 = smul.u32 8, %s23
          %p226 = scmp.lt.s32.totalorder %s22, 1
          %s227 = scalar_select %p226, %s22, 1
          %p228 = scmp.lt.s32.totalorder %s225, 31
          %s229 = scalar_select %p228, %s225, 31
          %s230 = smul.addr %s227, 32
          %s231 = sadd.s32 %s229, %s230
          %s232 = smul.addr %s231, 4
          %s233 = scalar_lea.vmem %s0, %s232
          %s234 = smul.u32 8, %s23
        $region36: #{_fused_backbone_head.1} parent=31 // pred_fallthru
          _
        // Predicated region
        $region37: #{_fused_backbone_head.1} parent=31 // pred_check
          %p235 = pneg %p96
        $region38: #{_fused_backbone_head.1} parent=31 // pred_check_branch
          %237 = sbr.rel (%p235) target = $region40
        $region39: #{_fused_backbone_head.1} parent=31 // pred_region
          %p238 = scmp.lt.s32.totalorder %s23, 3
          %s239 = scalar_select %p238, %s23, 3
          %s240 = scalar_lea.vmem %s2, %s239
        $region40: #{_fused_backbone_head.1} parent=31 // pred_fallthru
          _
      $region32: #{_fused_backbone_head.1} parent=5 // pred_fallthru
        _
      %p241 = scmp.le.s32.totalorder 1, %s15
      %p242 = scmp.lt.s32.totalorder %s15, 9
      %p243 = pnand %p241, %p242
      %p244 = pneg %p243
      // Predicated region
      $region41: #{_fused_backbone_head.1} parent=5 // pred_check
        _
      $region42: #{_fused_backbone_head.1} parent=5 // pred_check_branch
        %246 = sbr.rel (%p243) target = $region44
      $region43: #{_fused_backbone_head.1} parent=5 // pred_region
        %s247 = ssub.s32 %s15, 1
        %s248 = smul.u32 8, %s25
        %p249 = scmp.lt.s32.totalorder %s24, 1
        %s250 = scalar_select %p249, %s24, 1
        %p251 = scmp.lt.s32.totalorder %s248, 31
        %s252 = scalar_select %p251, %s248, 31
        %s253 = smul.addr %s250, 32
        %s254 = sadd.s32 %s252, %s253
        %s255 = smul.addr %s254, 4
        %s256 = scalar_lea.vmem %s0, %s255
        %p257 = pneg %p55
        %p258 = pneg %p52
        %p259 = pneg %p76
        %p260 = pneg %p73
        %p261 = scmp.lt.s32.totalorder %s25, 3
        %s262 = scalar_select %p261, %s25, 3
        %s263 = scalar_lea.vmem %s2, %s262
        %p264 = pneg %p102
        %p265 = pneg %p99
        %p266 = pneg %p123
        %p267 = pneg %p120
        %p268 = pneg %p144
        %p269 = pneg %p141
        %p270 = pneg %p165
        %p271 = pneg %p162
        %p272 = pneg %p191
        %p273 = pneg %p188
        %s274 = sand.u32 %s178, 1
        %s275 = scalar_lea.sflag [#allocation4], %s274
        %s276 = sand.u32 %s178, 1
        %s277 = scalar_lea.vmem [#allocation3], %s276
        %s278 = smul.u32 8, %s25
        %p279 = scmp.lt.s32.totalorder %s24, 1
        %s280 = scalar_select %p279, %s24, 1
        %p281 = scmp.lt.s32.totalorder %s278, 31
        %s282 = scalar_select %p281, %s278, 31
        %s283 = smul.addr %s280, 32
        %s284 = sadd.s32 %s282, %s283
        %s285 = smul.addr %s284, 4
        %s286 = scalar_lea.vmem %s0, %s285
        %s287 = smul.u32 8, %s25
        %p288 = scmp.lt.s32.totalorder %s25, 3
        %s289 = scalar_select %p288, %s25, 3
        %s290 = scalar_lea.vmem %s2, %s289
        %p292 = scmp.eq.s32.totalorder %s25, 0
        // Predicated region
        $region45: #{_fused_backbone_head.1} parent=43 // pred_check
          %p293 = pneg %p292
        $region46: #{_fused_backbone_head.1} parent=43 // pred_check_branch
          %295 = sbr.rel (%p293) target = $region48
        $region47: #{_fused_backbone_head.1} parent=43 // pred_region
          %296 = vst [vmem:[#allocation2] sm:$0x1] 0.0
        $region48: #{_fused_backbone_head.1} parent=43 // pred_fallthru
          _
        %v297 = vld [vmem:[%s286] sm:$0xf]
        %v298 = vld [vmem:[%s286 + $0x4] sm:$0xf]
        %v299 = vld [vmem:[%s286 + $0x8] sm:$0xf]
        %v300 = vld [vmem:[%s286 + $0xc] sm:$0xf]
        %v301 = vld [vmem:[%s286 + $0x10] sm:$0xf]
        %v302 = vld [vmem:[%s286 + $0x14] sm:$0xf]
        %v303 = vld [vmem:[%s286 + $0x18] sm:$0xf]
        %v304 = vld [vmem:[%s286 + $0x1c] sm:$0xf]
        %v305 = vld [vmem:[%s1] sm:$0xf]
        %v306 = vld [vmem:[%s1 + $0x4] sm:$0xf]
        %v307 = vld [vmem:[%s1 + $0x8] sm:$0xf]
        %v308 = vld [vmem:[%s1 + $0xc] sm:$0xf]
        %v309 = vld [vmem:[%s1 + $0x10] sm:$0x3]
        %v310 = vld [vmem:[%s3] sm:$0x1]
        %v312 = vlaneseq
        %v313 = vshrl.u32 %v312, 7
        %v314 = vsub.s32 0, %v313
        %v315 = vrot.slane %v310, %v314
        %v325 = vunpack.c.l.b16 %v297
        %v326 = vunpack.c.l.b16 %v298
        %v327 = vunpack.c.l.b16 %v299
        %v328 = vunpack.c.l.b16 %v300
        %v329 = vunpack.c.l.b16 %v301
        %v330 = vunpack.c.l.b16 %v302
        %v331 = vunpack.c.l.b16 %v303
        %v332 = vunpack.c.l.b16 %v304
        %v333 = vpack.c.b16 %v326, %v325
        %v334 = vpack.c.b16 %v328, %v327
        %v335 = vpack.c.b16 %v330, %v329
        %v336 = vpack.c.b16 %v332, %v331
        %v342 = vunpack.c.l.b16 %v305
        %v343 = vunpack.c.l.b16 %v306
        %v344 = vunpack.c.l.b16 %v307
        %v345 = vunpack.c.l.b16 %v308
        %v346 = vunpack.c.l.b16 %v309
        %v347 = vpack.c.b16 %v343, %v342
        %v348 = vpack.c.b16 %v345, %v344
        %v349 = vpack.c.b16 %v346, %v346
        %vm352 = vcmask 293888
        %v354 = vsel %vm352, %v333, 0
        %v357 = vsel %vm352, %v334, 0
        %v360 = vsel %vm352, %v335, 0
        %v363 = vsel %vm352, %v336, 0
        %vm365 = vcmask 1041408
        %v367 = vsel %vm365, %v349, 0
        %369 = vmatprep.subr.bf16.mxu0 0
        %370 = vmatpush1.bf16.msra.mxu0 %v347
        %371 = vmatprep.subr.bf16.mxu0 0
        %372 = vmatpush1.bf16.msra.mxu0 %v348
        %373 = vmatprep.subr.bf16.mxu0 0
        %374 = vmatpush1.bf16.msra.mxu0 %v367
        %375 = vmatprep.subr.bf16.mxu0 0
        %376 = vmatpush1.bf16.msra.mxu0 0
        %377 = vmatprep.subr.bf16.mxu0 0
        %378 = vmatpush1.bf16.msra.mxu0 0
        %379 = vmatprep.subr.bf16.mxu0 0
        %380 = vmatpush1.bf16.msra.mxu0 0
        %381 = vmatprep.subr.bf16.mxu0 0
        %382 = vmatpush1.bf16.msra.mxu0 0
        %383 = vmatprep.subr.bf16.mxu0 0
        %384 = vmatpush1.bf16.msra.mxu0 0
        %385 = vmatprep.subr.bf16.mxu0 0
        %386 = vmatpush1.bf16.msra.mxu0 0
        %387 = vmatprep.subr.bf16.mxu0 0
        %388 = vmatpush1.bf16.msra.mxu0 0
        %389 = vmatprep.subr.bf16.mxu0 0
        %390 = vmatpush1.bf16.msra.mxu0 0
        %391 = vmatprep.subr.bf16.mxu0 0
        %392 = vmatpush1.bf16.msra.mxu0 0
        %393 = vmatprep.subr.bf16.mxu0 0
        %394 = vmatpush1.bf16.msra.mxu0 0
        %395 = vmatprep.subr.bf16.mxu0 0
        %396 = vmatpush1.bf16.msra.mxu0 0
        %397 = vmatprep.subr.bf16.mxu0 0
        %398 = vmatpush1.bf16.msra.mxu0 0
        %399 = vmatprep.subr.bf16.mxu0 0
        %400 = vmatpush1.bf16.msra.mxu0 0
        %401 = vmatprep.mubr.bf16.mxu0 0
        %402 = vmatmul.mubr.bf16.gmra.mrb[0].mxu0 %v354
        %v403 = vpop.f32.mrb[0].mxu0
        %v404 = vadd.f32 %v315, %v403
        %v405 = vpop.f32.mrb[0].mxu0
        %v406 = vpop.f32.mrb[0].mxu0
        %v407 = vadd.f32 %v315, %v406
        %v408 = vpop.f32.mrb[0].mxu0
        %409 = vmatprep.mubr.bf16.mxu0 0
        %410 = vmatmul.mubr.bf16.gmra.mrb[0].mxu0 %v357
        %v411 = vpop.f32.mrb[0].mxu0
        %v412 = vadd.f32 %v315, %v411
        %v413 = vpop.f32.mrb[0].mxu0
        %v414 = vpop.f32.mrb[0].mxu0
        %v415 = vadd.f32 %v315, %v414
        %v416 = vpop.f32.mrb[0].mxu0
        %417 = vmatprep.mubr.bf16.mxu0 0
        %418 = vmatmul.mubr.bf16.gmra.mrb[0].mxu0 %v360
        %v419 = vpop.f32.mrb[0].mxu0
        %v420 = vadd.f32 %v315, %v419
        %v421 = vpop.f32.mrb[0].mxu0
        %v422 = vpop.f32.mrb[0].mxu0
        %v423 = vadd.f32 %v315, %v422
        %v424 = vpop.f32.mrb[0].mxu0
        %425 = vmatprep.mubr.bf16.mxu0 0
        %426 = vmatmul.mubr.bf16.gmra.mrb[0].mxu0 %v363
        %v427 = vpop.f32.mrb[0].mxu0
        %v428 = vadd.f32 %v315, %v427
        %v429 = vpop.f32.mrb[0].mxu0
        %v430 = vpop.f32.mrb[0].mxu0
        %v431 = vadd.f32 %v315, %v430
        %v432 = vpop.f32.mrb[0].mxu0
        %433 = vdwg.mxu0
        %v434 = vmax.f32 %v404, 1e-06
        %v435 = vmax.f32 %v407, 1e-06
        %v436 = vmax.f32 %v412, 1e-06
        %v437 = vmax.f32 %v415, 1e-06
        %v438 = vmax.f32 %v420, 1e-06
        %v439 = vmax.f32 %v423, 1e-06
        %v440 = vmax.f32 %v428, 1e-06
        %v441 = vmax.f32 %v431, 1e-06
        %v442 = vmul.f32 %v434, %v434
        %v443 = vmul.f32 %v435, %v435
        %v444 = vmul.f32 %v436, %v436
        %v445 = vmul.f32 %v437, %v437
        %v446 = vmul.f32 %v438, %v438
        %v447 = vmul.f32 %v439, %v439
        %v448 = vmul.f32 %v440, %v440
        %v449 = vmul.f32 %v441, %v441
        %v450 = vmul.f32 %v442, %v434
        %v451 = vmul.f32 %v443, %v435
        %v452 = vmul.f32 %v444, %v436
        %v453 = vmul.f32 %v445, %v437
        %v454 = vmul.f32 %v446, %v438
        %v455 = vmul.f32 %v447, %v439
        %v456 = vmul.f32 %v448, %v440
        %v457 = vmul.f32 %v449, %v441
        %v458 = vld [vmem:[#allocation2] sm:$0x1]
        %v459 = vld [vmem:[%s290] sm:$0x1]
        %vm460 = vcmask 523264
        %v462 = vsel %vm460, %v459, 0
        %464 = vmatprep.subr.mxu0 0.0
        %465 = vmatpush1.msra.mxu0 %v450
        %466 = vmatprep.subr.mxu0 0.0
        %467 = vmatpush1.msra.mxu0 %v451
        %468 = vmatprep.subr.mxu0 0.0
        %469 = vmatpush1.msra.mxu0 %v452
        %470 = vmatprep.subr.mxu0 0.0
        %471 = vmatpush1.msra.mxu0 %v453
        %472 = vmatprep.subr.mxu0 0.0
        %473 = vmatpush1.msra.mxu0 %v454
        %474 = vmatprep.subr.mxu0 0.0
        %475 = vmatpush1.msra.mxu0 %v455
        %476 = vmatprep.subr.mxu0 0.0
        %477 = vmatpush1.msra.mxu0 %v456
        %478 = vmatprep.subr.mxu0 0.0
        %479 = vmatpush1.msra.mxu0 %v457
        %480 = vmatprep.subr.mxu0 0.0
        %481 = vmatpush1.msra.mxu0 0.0
        %482 = vmatprep.subr.mxu0 0.0
        %483 = vmatpush1.msra.mxu0 0.0
        %484 = vmatprep.subr.mxu0 0.0
        %485 = vmatpush1.msra.mxu0 0.0
        %486 = vmatprep.subr.mxu0 0.0
        %487 = vmatpush1.msra.mxu0 0.0
        %488 = vmatprep.subr.mxu0 0.0
        %489 = vmatpush1.msra.mxu0 0.0
        %490 = vmatprep.subr.mxu0 0.0
        %491 = vmatpush1.msra.mxu0 0.0
        %492 = vmatprep.subr.mxu0 0.0
        %493 = vmatpush1.msra.mxu0 0.0
        %494 = vmatprep.subr.mxu0 0.0
        %495 = vmatpush1.msra.mxu0 0.0
        %496 = vmatprep.subr.mxu0 0.0
        %497 = vmatpush1.msra.mxu0 0.0
        %498 = vmatprep.subr.mxu0 0.0
        %499 = vmatpush1.msra.mxu0 0.0
        %500 = vmatprep.subr.mxu0 0.0
        %501 = vmatpush1.msra.mxu0 0.0
        %502 = vmatprep.subr.mxu0 0.0
        %503 = vmatpush1.msra.mxu0 0.0
        %504 = vmatprep.subr.mxu0 0.0
        %505 = vmatpush1.msra.mxu0 0.0
        %506 = vmatprep.subr.mxu0 0.0
        %507 = vmatpush1.msra.mxu0 0.0
        %508 = vmatprep.subr.mxu0 0.0
        %509 = vmatpush1.msra.mxu0 0.0
        %510 = vmatprep.subr.mxu0 0.0
        %511 = vmatpush1.msra.mxu0 0.0
        %512 = vmatprep.subr.mxu0 0.0
        %513 = vmatpush1.msra.mxu0 0.0
        %514 = vmatprep.subr.mxu0 0.0
        %515 = vmatpush1.msra.mxu0 0.0
        %516 = vmatprep.subr.mxu0 0.0
        %517 = vmatpush1.msra.mxu0 0.0
        %518 = vmatprep.subr.mxu0 0.0
        %519 = vmatpush1.msra.mxu0 0.0
        %520 = vmatprep.subr.mxu0 0.0
        %521 = vmatpush1.msra.mxu0 0.0
        %522 = vmatprep.subr.mxu0 0.0
        %523 = vmatpush1.msra.mxu0 0.0
        %524 = vmatprep.subr.mxu0 0.0
        %525 = vmatpush1.msra.mxu0 0.0
        %526 = vmatprep.subr.mxu0 0.0
        %527 = vmatpush1.msra.mxu0 0.0
        %528 = vmatprep.mubr.f32.mxu0 0.0
        %529 = vmatmul.mubr.f32.gmra.mrb[0].mxu0 %v462
        %v530 = vpop.f32.mrb[0].mxu0
        %v531 = vadd.f32 0.0, %v530
        %v532 = vpop.f32.mrb[0].mxu0
        %533 = vdwg.mxu0
        %v534 = vadd.f32 %v458, %v531
        %535 = vst [vmem:[#allocation2] sm:$0x1] %v534
        %p536 = scmp.eq.s32.totalorder %s25, 3
        // Predicated region
        $region49: #{_fused_backbone_head.1} parent=43 // pred_check
          %p537 = pneg %p536
        $region50: #{_fused_backbone_head.1} parent=43 // pred_check_branch
          %539 = sbr.rel (%p537) target = $region52
        $region51: #{_fused_backbone_head.1} parent=43 // pred_region
          %v540 = vld [vmem:[#allocation2] sm:$0x1]
          %v541 = vmul.f32 %v540, 0.00390625
          %v542 = vlog2.pop %v541
          %v543 = vmul.f32 %v542, 0.6931472
          %v544 = vmul.f32 %v543, 0.33333334
          %v545 = vmul.f32 %v544, 1.442695
          %v546 = vpow.pop %v545
          %v547 = vld [vmem:[%s4] sm:$0xff]
          %v548 = vld [vmem:[%s4 + $0x8] sm:$0xff]
          %v549 = vld [vmem:[%s4 + $0x10] sm:$0xff]
          %v550 = vld [vmem:[%s4 + $0x18] sm:$0xff]
          %v551 = vld [vmem:[%s4 + $0x20] sm:$0xff]
          %v552 = vld [vmem:[%s4 + $0x28] sm:$0xff]
          %v553 = vld [vmem:[%s4 + $0x30] sm:$0xff]
          %v554 = vld [vmem:[%s4 + $0x38] sm:$0xff]
          %v555 = vld [vmem:[%s4 + $0x40] sm:$0xff]
          %v556 = vld [vmem:[%s4 + $0x48] sm:$0xff]
          %v557 = vld [vmem:[%s4 + $0x50] sm:$0xff]
          %v558 = vld [vmem:[%s4 + $0x58] sm:$0xff]
          %v559 = vld [vmem:[%s4 + $0x60] sm:$0xff]
          %v560 = vld [vmem:[%s4 + $0x68] sm:$0xff]
          %v561 = vld [vmem:[%s4 + $0x70] sm:$0xff]
          %v562 = vld [vmem:[%s4 + $0x78] sm:$0xff]
          %v563 = vld [vmem:[%s5] sm:$0x1]
          %564 = vmatprep.subr.mxu0 0.0
          %565 = vmatpush1.msra.mxu0 %v547
          %566 = vmatprep.subr.mxu0 0.0
          %567 = vmatpush1.msra.mxu0 %v548
          %568 = vmatprep.subr.mxu0 0.0
          %569 = vmatpush1.msra.mxu0 %v549
          %570 = vmatprep.subr.mxu0 0.0
          %571 = vmatpush1.msra.mxu0 %v550
          %572 = vmatprep.subr.mxu0 0.0
          %573 = vmatpush1.msra.mxu0 %v551
          %574 = vmatprep.subr.mxu0 0.0
          %575 = vmatpush1.msra.mxu0 %v552
          %576 = vmatprep.subr.mxu0 0.0
          %577 = vmatpush1.msra.mxu0 %v553
          %578 = vmatprep.subr.mxu0 0.0
          %579 = vmatpush1.msra.mxu0 %v554
          %580 = vmatprep.subr.mxu0 0.0
          %581 = vmatpush1.msra.mxu0 %v555
          %582 = vmatprep.subr.mxu0 0.0
          %583 = vmatpush1.msra.mxu0 %v556
          %584 = vmatprep.subr.mxu0 0.0
          %585 = vmatpush1.msra.mxu0 %v557
          %586 = vmatprep.subr.mxu0 0.0
          %587 = vmatpush1.msra.mxu0 %v558
          %588 = vmatprep.subr.mxu0 0.0
          %589 = vmatpush1.msra.mxu0 %v559
          %590 = vmatprep.subr.mxu0 0.0
          %591 = vmatpush1.msra.mxu0 %v560
          %592 = vmatprep.subr.mxu0 0.0
          %593 = vmatpush1.msra.mxu0 %v561
          %594 = vmatprep.subr.mxu0 0.0
          %595 = vmatpush1.msra.mxu0 %v562
          %596 = vmatprep.subr.mxu0 0.0
          %597 = vmatpush1.msra.mxu0 0.0
          %598 = vmatprep.subr.mxu0 0.0
          %599 = vmatpush1.msra.mxu0 0.0
          %600 = vmatprep.subr.mxu0 0.0
          %601 = vmatpush1.msra.mxu0 0.0
          %602 = vmatprep.subr.mxu0 0.0
          %603 = vmatpush1.msra.mxu0 0.0
          %604 = vmatprep.subr.mxu0 0.0
          %605 = vmatpush1.msra.mxu0 0.0
          %606 = vmatprep.subr.mxu0 0.0
          %607 = vmatpush1.msra.mxu0 0.0
          %608 = vmatprep.subr.mxu0 0.0
          %609 = vmatpush1.msra.mxu0 0.0
          %610 = vmatprep.subr.mxu0 0.0
          %611 = vmatpush1.msra.mxu0 0.0
          %612 = vmatprep.subr.mxu0 0.0
          %613 = vmatpush1.msra.mxu0 0.0
          %614 = vmatprep.subr.mxu0 0.0
          %615 = vmatpush1.msra.mxu0 0.0
          %616 = vmatprep.subr.mxu0 0.0
          %617 = vmatpush1.msra.mxu0 0.0
          %618 = vmatprep.subr.mxu0 0.0
          %619 = vmatpush1.msra.mxu0 0.0
          %620 = vmatprep.subr.mxu0 0.0
          %621 = vmatpush1.msra.mxu0 0.0
          %622 = vmatprep.subr.mxu0 0.0
          %623 = vmatpush1.msra.mxu0 0.0
          %624 = vmatprep.subr.mxu0 0.0
          %625 = vmatpush1.msra.mxu0 0.0
          %626 = vmatprep.subr.mxu0 0.0
          %627 = vmatpush1.msra.mxu0 0.0
          %628 = vmatprep.mubr.f32.mxu0 0.0
          %629 = vmatmul.mubr.f32.gmra.mrb[0].mxu0 %v546
          %v630 = vpop.f32.mrb[0].mxu0
          %v631 = vadd.f32 %v563, %v630
          %v632 = vpop.f32.mrb[0].mxu0
          %633 = vdwg.mxu0
          %634 = vst [vmem:[%s277] sm:$0x1] %v631
        $region52: #{_fused_backbone_head.1} parent=43 // pred_fallthru
          _
        %s635 = sand.u32 %s178, 1
        %s636 = scalar_lea.sflag [#allocation4], %s635
        %s637 = sand.u32 %s178, 1
        %s638 = scalar_lea.vmem [#allocation3], %s637
        // Predicated region
        $region53: #{_fused_backbone_head.1} parent=43 // pred_check
          %p639 = pneg %p188
        $region54: #{_fused_backbone_head.1} parent=43 // pred_check_branch
          %641 = sbr.rel (%p639) target = $region56
        $region55: #{_fused_backbone_head.1} parent=43 // pred_region
          %s643 = ssub.s32 16, 16
          %644 = vsyncadd %s636, %s643
          %s645 = smul.addr %s24, 16
          %s646 = scalar_lea.hbm %s6, %s645
          %s648 = sshll.u32 %s638, 4
          %s649 = int_to_ptr.vmem [resolvable:$true] %s648
          %651 = dma.vmem_to_hbm [thread:$0]  %s649, 16, %s646, %s636
        $region56: #{_fused_backbone_head.1} parent=43 // pred_fallthru
          _
      $region44: #{_fused_backbone_head.1} parent=5 // pred_fallthru
        _
      %p652 = scmp.le.s32.totalorder 2, %s15
      // Predicated region
      $region57: #{_fused_backbone_head.1} parent=5 // pred_check
        %p653 = pneg %p652
      $region58: #{_fused_backbone_head.1} parent=5 // pred_check_branch
        %655 = sbr.rel (%p653) target = $region60
      $region59: #{_fused_backbone_head.1} parent=5 // pred_region
        %s656 = ssub.s32 %s15, 2
        // Predicated region
        $region61: #{_fused_backbone_head.1} parent=59 // pred_check
          %p657 = pneg %p194
        $region62: #{_fused_backbone_head.1} parent=59 // pred_check_branch
          %659 = sbr.rel (%p657) target = $region64
        $region63: #{_fused_backbone_head.1} parent=59 // pred_region
          %s660 = sand.u32 %s179, 1
          %s661 = scalar_lea.sflag [#allocation4], %s660
          %s662 = sand.u32 %s179, 1
          %s663 = scalar_lea.vmem [#allocation3], %s662
          %664 = dma.done %s661, 16
        $region64: #{_fused_backbone_head.1} parent=59 // pred_fallthru
          _
      $region60: #{_fused_backbone_head.1} parent=5 // pred_fallthru
        _
    $region6: #{_fused_backbone_head.1} parent=1 // loop_footer
      %s19 = sadd.s32 1, %s15
    $region7: #{_fused_backbone_head.1} parent=1 // loop_footer_branch
      %14 = sbr.rel target = $region3
    $region8: #{_fused_backbone_head.1} parent=1 // loop_exit
      _
    %665 = vsyncpa [#allocation4], 1
    %s666 = scalar_lea.sflag [#allocation4], 1
    %667 = vsyncpa %s666, 1

</llo_original>
